<compile_context>
chip_gen: v5e
topology: v5e:2x2
jax: 0.10.0
libtpu: 0.0.40
codegen_flags: <defaults>
</compile_context>

<pallas_src>
import functools
import numpy as np
import jax
import jax.numpy as jnp
from jax.experimental import pallas as pl
from jax.experimental.pallas import tpu as pltpu


def _round_up(x, m):
    return ((x + m - 1) // m) * m


# ----------------------------------------------------------------------------
# Pallas kernel 1: C = act(A @ B + bias), tiled over (M, N, K).
#   A,B in bf16, accumulation in the f32 output block (resident across K).
# ----------------------------------------------------------------------------
def _mm_kernel(a_ref, b_ref, bias_ref, o_ref, *, nk, act):
    k = pl.program_id(2)

    @pl.when(k == 0)
    def _():
        o_ref[...] = jnp.zeros_like(o_ref)

    o_ref[...] += jnp.dot(a_ref[...], b_ref[...],
                          preferred_element_type=jnp.float32)

    @pl.when(k == nk - 1)
    def _():
        r = o_ref[...] + bias_ref[...]          # (tm,tn) + (1,tn)
        if act == "leaky":
            r = jnp.where(r > 0, r, 0.2 * r)
        elif act == "relu":
            r = jnp.maximum(r, 0.0)
        elif act == "sigmoid":
            r = jax.nn.sigmoid(r)
        elif act == "tanh":
            r = jnp.tanh(r)
        o_ref[...] = r


def matmul_bias_act(a, b, bias, act="none"):
    """act(a @ b + bias); a:(M,K), b:(K,N), bias:(N,) -> (M,N) float32."""
    M, K = a.shape
    K2, N = b.shape
    assert K == K2

    tm = min(256, _round_up(M, 16))          # bf16 sublane packing -> multiple of 16
    Mp = _round_up(M, tm)
    tn = min(256, _round_up(N, 128))
    Np = _round_up(N, tn)
    tk = min(512, _round_up(K, 128))
    Kp = _round_up(K, tk)
    nm, nn, nk = Mp // tm, Np // tn, Kp // tk

    a_p = a.astype(jnp.bfloat16)
    if (Mp, Kp) != (M, K):
        a_p = jnp.pad(a_p, ((0, Mp - M), (0, Kp - K)))
    b_p = b.astype(jnp.bfloat16)
    if (Kp, Np) != (K, N):
        b_p = jnp.pad(b_p, ((0, Kp - K), (0, Np - N)))
    bias_p = bias.astype(jnp.float32)
    if Np != N:
        bias_p = jnp.pad(bias_p, ((0, Np - N),))
    bias_p = bias_p.reshape(1, Np)

    vmem = 2 * (2 * (tm * tk * 2 + tk * tn * 2) + tm * tn * 4 + tn * 4) + (4 << 20)
    vmem = int(min(max(vmem, 8 << 20), 48 << 20))
    flops = 2 * Mp * Np * Kp
    transc = Mp * Np if act in ("sigmoid", "tanh") else 0
    bytes_acc = nn * Mp * Kp * 2 + nm * Kp * Np * 2 + Mp * Np * 4 + Np * 4

    out = pl.pallas_call(
        functools.partial(_mm_kernel, nk=nk, act=act),
        out_shape=jax.ShapeDtypeStruct((Mp, Np), jnp.float32),
        grid_spec=pltpu.PrefetchScalarGridSpec(
            num_scalar_prefetch=0,
            grid=(nm, nn, nk),
            in_specs=[
                pl.BlockSpec((tm, tk), lambda m, n, k: (m, k)),
                pl.BlockSpec((tk, tn), lambda m, n, k: (k, n)),
                pl.BlockSpec((1, tn), lambda m, n, k: (0, n)),
            ],
            out_specs=pl.BlockSpec((tm, tn), lambda m, n, k: (m, n)),
        ),
        compiler_params=pltpu.CompilerParams(
            dimension_semantics=("parallel", "parallel", "arbitrary"),
            vmem_limit_bytes=vmem),
        cost_estimate=pl.CostEstimate(flops=flops, transcendentals=transc,
                                      bytes_accessed=bytes_acc),
    )(a_p, b_p, bias_p)

    if (Mp, Np) != (M, N):
        out = out[:M, :N]
    return out


# ----------------------------------------------------------------------------
# Pallas kernel 2: grouped conv matmul. A:(G,Mp,Kg) x W:(G,Kg,cout_g),
# per-group dots unrolled inside the kernel (no block-diagonal zero-padding).
# ----------------------------------------------------------------------------
def _grouped_mm_kernel(a_ref, b_ref, o_ref, *, G, act):
    for g in range(G):
        r = jnp.dot(a_ref[g], b_ref[g], preferred_element_type=jnp.float32)
        if act == "leaky":
            r = jnp.where(r > 0, r, 0.2 * r)
        o_ref[g] = r


@functools.partial(jax.jit, static_argnames=("G", "dilation", "act"))
def _grouped_conv_impl(x, w, *, G, dilation, act):
    # x: (B,H,W,C) with C = G*cin_g ; w: (G, 9*cin_g, cout_g)
    B, H, W, C = x.shape
    cin_g = C // G
    Kg = 9 * cin_g
    cout_g = w.shape[-1]
    d = dilation
    M = B * H * W

    xg = x.reshape(B, H, W, G, cin_g).transpose(3, 0, 1, 2, 4)   # (G,B,H,W,cin_g)
    xp = jnp.pad(xg, ((0, 0), (0, 0), (d, d), (d, d), (0, 0)))
    taps = [xp[:, :, i * d:i * d + H, j * d:j * d + W, :]
            for i in range(3) for j in range(3)]
    a = jnp.stack(taps, axis=4).reshape(G, M, Kg)                # (tap, ci) order

    tm = min(256, _round_up(M, 16))
    Mp = _round_up(M, tm)
    if Mp != M:
        a = jnp.pad(a, ((0, 0), (0, Mp - M), (0, 0)))
    a = a.astype(jnp.bfloat16)
    nm = Mp // tm

    vmem = 2 * (2 * G * tm * Kg * 2 + G * Kg * cout_g * 2 + G * tm * cout_g * 4) + (4 << 20)
    vmem = int(min(max(vmem, 8 << 20), 48 << 20))

    out = pl.pallas_call(
        functools.partial(_grouped_mm_kernel, G=G, act=act),
        out_shape=jax.ShapeDtypeStruct((G, Mp, cout_g), jnp.float32),
        grid_spec=pltpu.PrefetchScalarGridSpec(
            num_scalar_prefetch=0,
            grid=(nm,),
            in_specs=[
                pl.BlockSpec((G, tm, Kg), lambda m: (0, m, 0)),
                pl.BlockSpec((G, Kg, cout_g), lambda m: (0, 0, 0)),
            ],
            out_specs=pl.BlockSpec((G, tm, cout_g), lambda m: (0, m, 0)),
        ),
        compiler_params=pltpu.CompilerParams(
            dimension_semantics=("parallel",),
            vmem_limit_bytes=vmem),
        cost_estimate=pl.CostEstimate(
            flops=2 * G * Mp * Kg * cout_g, transcendentals=0,
            bytes_accessed=G * (Mp * Kg * 2 + Kg * cout_g * 2 + Mp * cout_g * 4)),
    )(a, w)

    out = out[:, :M].transpose(1, 0, 2).reshape(B, H, W, G * cout_g)
    return out


# ----------------------------------------------------------------------------
# Pallas kernel 3: fused SE-scale + residual add:  out = residual + x * scale[b,:]
# ----------------------------------------------------------------------------
def _se_res_kernel(x_ref, s_ref, r_ref, o_ref):
    o_ref[...] = r_ref[...] + x_ref[...] * s_ref[...]


@jax.jit
def se_residual_add(x, scale, residual):
    B, H, W, C = x.shape
    HW = H * W
    t = HW
    for cand in (512, 256, 128, 64, 32, 16, 8):
        if HW % cand == 0 and cand * C * 4 <= (2 << 20):
            t = cand
            break
    x2 = x.reshape(B, HW, C).astype(jnp.float32)
    r2 = residual.reshape(B, HW, C).astype(jnp.float32)
    s2 = scale.reshape(B, 1, C).astype(jnp.float32)
    out = pl.pallas_call(
        _se_res_kernel,
        out_shape=jax.ShapeDtypeStruct((B, HW, C), jnp.float32),
        grid_spec=pltpu.PrefetchScalarGridSpec(
            num_scalar_prefetch=0,
            grid=(B, HW // t),
            in_specs=[
                pl.BlockSpec((1, t, C), lambda b, h: (b, h, 0)),
                pl.BlockSpec((1, 1, C), lambda b, h: (b, 0, 0)),
                pl.BlockSpec((1, t, C), lambda b, h: (b, h, 0)),
            ],
            out_specs=pl.BlockSpec((1, t, C), lambda b, h: (b, h, 0)),
        ),
        compiler_params=pltpu.CompilerParams(
            dimension_semantics=("parallel", "parallel")),
    )(x2, s2, r2)
    return out.reshape(B, H, W, C)


# ----------------------------------------------------------------------------
# im2col (NHWC, tap-major) + conv / convT wrappers (plain-JAX glue around kernels).
# ----------------------------------------------------------------------------
def _im2col_nhwc(x, k, stride, padding, dilation):
    B, H, W, C = x.shape
    Ho = (H + 2 * padding - dilation * (k - 1) - 1) // stride + 1
    Wo = (W + 2 * padding - dilation * (k - 1) - 1) // stride + 1
    xp = jnp.pad(x, ((0, 0), (padding, padding), (padding, padding), (0, 0)))
    taps = []
    for i in range(k):
        for j in range(k):
            hs, ws = i * dilation, j * dilation
            taps.append(xp[:, hs:hs + stride * (Ho - 1) + 1:stride,
                           ws:ws + stride * (Wo - 1) + 1:stride, :])
    col = jnp.concatenate(taps, axis=-1)            # column order = (tap, channel)
    return col.reshape(B * Ho * Wo, k * k * C), Ho, Wo


@functools.partial(jax.jit,
                   static_argnames=("k", "stride", "padding", "dilation", "act"))
def _conv2d_impl(x, Wm, b, *, k, stride, padding, dilation, act):
    B, H, W, C = x.shape
    cout = Wm.shape[-1]
    if k == 1 and stride == 1 and padding == 0:
        col, Ho, Wo = x.reshape(B * H * W, C), H, W
    else:
        col, Ho, Wo = _im2col_nhwc(x, k, stride, padding, dilation)
    y = matmul_bias_act(col, Wm, b, act)
    return y.reshape(B, Ho, Wo, cout)


def conv2d(p, x, act="none"):
    return _conv2d_impl(x, p["Wm"], p["b"], k=p["k"], stride=p["stride"],
                        padding=p["padding"], dilation=p["dilation"], act=act)


def grouped_conv(p, x, act="leaky"):
    return _grouped_conv_impl(x, p["Wg"], G=p["G"], dilation=p["dilation"], act=act)


@functools.partial(jax.jit, static_argnames=("offsets", "act"))
def _convT_s2_impl(x, b, w00, w01, w10, w11, *, offsets, act):
    # stride-2, k=3, pad=1, out_pad=1 ConvTranspose via 4-phase sub-pixel conv.
    B, H, W, C = x.shape
    cout = w00.shape[-1]
    xp = jnp.pad(x, ((0, 0), (0, 1), (0, 1), (0, 0)))
    out = jnp.zeros((B, 2 * H, 2 * W, cout), jnp.float32)
    ws = (w00, w01, w10, w11)
    for idx, (di, dj) in enumerate(((0, 0), (0, 1), (1, 0), (1, 1))):
        cols = [xp[:, du:du + H, dv:dv + W, :] for (du, dv) in offsets[idx]]
        a = jnp.concatenate(cols, axis=-1).reshape(B * H * W, -1)
        y = matmul_bias_act(a, ws[idx], b, act).reshape(B, H, W, cout)
        out = out.at[:, di::2, dj::2, :].set(y)
    return out


def conv_transpose2d(p, x, act="none"):
    if p["stride"] == 1:
        return _conv2d_impl(x, p["Wm"], p["b"], k=p["k"], stride=1,
                            padding=p["padding"], dilation=1, act=act)
    return _convT_s2_impl(x, p["b"],
                          p["phases"][0]["Wm"], p["phases"][1]["Wm"],
                          p["phases"][2]["Wm"], p["phases"][3]["Wm"],
                          offsets=tuple(ph["offsets"] for ph in p["phases"]),
                          act=act)


# ----------------------------------------------------------------------------
# Deterministic synthetic parameters.
# ----------------------------------------------------------------------------
_RNG = np.random.default_rng(1234)


def make_conv(cin, cout, k, stride=1, padding=0, dilation=1, bias=True):
    fan_in = cin * k * k
    std = 1.0 / np.sqrt(fan_in)
    w = _RNG.normal(0.0, std, size=(cout, cin, k, k)).astype(np.float32)
    b = (_RNG.normal(0.0, std, size=(cout,)).astype(np.float32)
         if bias else np.zeros((cout,), np.float32))
    Wm = np.ascontiguousarray(w.transpose(2, 3, 1, 0).reshape(k * k * cin, cout))
    return dict(Wm=jnp.asarray(Wm, jnp.bfloat16), b=jnp.asarray(b),
                k=k, stride=stride, padding=padding, dilation=dilation, cout=cout)


def make_grouped_conv(D, groups, dilation):
    cin_g = D // groups                       # in == out == D for these blocks
    std = 1.0 / np.sqrt(cin_g * 9)
    w = _RNG.normal(0.0, std, size=(D, cin_g, 3, 3)).astype(np.float32)
    wg = w.reshape(groups, cin_g, cin_g, 3, 3)          # (G, cout_g, cin_g, kh, kw)
    Wg = np.ascontiguousarray(
        wg.transpose(0, 3, 4, 2, 1).reshape(groups, 9 * cin_g, cin_g))
    return dict(Wg=jnp.asarray(Wg, jnp.bfloat16), G=groups, dilation=dilation)


def make_se(C):
    mid = C // 16
    s1 = 1.0 / np.sqrt(C)
    w1 = _RNG.normal(0.0, s1, size=(mid, C)).astype(np.float32)
    b1 = _RNG.normal(0.0, s1, size=(mid,)).astype(np.float32)
    s2 = 1.0 / np.sqrt(mid)
    w2 = _RNG.normal(0.0, s2, size=(C, mid)).astype(np.float32)
    b2 = _RNG.normal(0.0, s2, size=(C,)).astype(np.float32)
    return dict(w1=jnp.asarray(w1.T), b1=jnp.asarray(b1),
                w2=jnp.asarray(w2.T), b2=jnp.asarray(b2))


def make_convT(cin, cout, k, stride, padding, output_padding):
    std = 1.0 / np.sqrt(cout * k * k)
    w = _RNG.normal(0.0, std, size=(cin, cout, k, k)).astype(np.float32)
    b = _RNG.normal(0.0, std, size=(cout,)).astype(np.float32)
    w_eq = np.ascontiguousarray(np.flip(w, axis=(2, 3)).transpose(1, 0, 2, 3))
    if stride == 1:
        Wm = np.ascontiguousarray(w_eq.transpose(2, 3, 1, 0).reshape(k * k * cin, cout))
        return dict(stride=1, k=k, padding=k - 1 - padding,
                    Wm=jnp.asarray(Wm, jnp.bfloat16), b=jnp.asarray(b), cout=cout)
    assert stride == 2 and k == 3 and padding == 1 and output_padding == 1

    def _taps(d):             # (kernel tap index, input offset)
        return [(1, 0)] if d == 0 else [(0, 0), (2, 1)]

    phases = []
    for di in (0, 1):
        for dj in (0, 1):
            offs, mats = [], []
            for (a, du) in _taps(di):
                for (bb, dv) in _taps(dj):
                    offs.append((du, dv))
                    mats.append(w_eq[:, :, a, bb].T)            # (cin, cout)
            Wph = np.ascontiguousarray(np.concatenate(mats, axis=0))
            phases.append(dict(offsets=tuple(offs),
                               Wm=jnp.asarray(Wph, jnp.bfloat16)))
    return dict(stride=2, b=jnp.asarray(b), cout=cout, phases=phases)


# ----------------------------------------------------------------------------
# Network building blocks (ResNeXt bottleneck, SE, pixel shuffle).
# ----------------------------------------------------------------------------
@jax.jit
def _se_scale(e, w1, b1, w2, b2):
    # tiny (M = batch) squeeze matmuls: plain jnp, not worth an MXU launch
    pooled = jnp.mean(e, axis=(1, 2))
    h = jax.nn.relu(pooled @ w1 + b1)
    return jax.nn.sigmoid(h @ w2 + b2)


def make_bottleneck(in_ch, out_ch, cardinality, dilate):
    D = out_ch // 2
    return dict(
        reduce=make_conv(in_ch, D, 1, bias=False),
        conv=make_grouped_conv(D, cardinality, dilate),
        expand=make_conv(D, out_ch, 1, bias=False),
        se=make_se(out_ch),
    )


def bottleneck_fwd(p, x):
    b = conv2d(p["reduce"], x, "leaky")
    b = grouped_conv(p["conv"], b, "leaky")
    e = conv2d(p["expand"], b, "none")
    s = _se_scale(e, p["se"]["w1"], p["se"]["b1"], p["se"]["w2"], p["se"]["b2"])
    return se_residual_add(e, s, x)          # x + e * s, fused in one Pallas pass


def pixel_shuffle(x, r):
    B, H, W, C = x.shape
    Co = C // (r * r)
    x = x.reshape(B, H, W, Co, r, r)
    x = x.transpose(0, 1, 4, 2, 5, 3)
    return x.reshape(B, H * r, W * r, Co)


# ----------------------------------------------------------------------------
# Generator / Colorizer.
# ----------------------------------------------------------------------------
def make_encoder_block_first(cin, cout):
    return [make_conv(cin, cout, 3, 1, 1), make_conv(cout, cout, 3, 1, 1)]


def make_encoder_block(cin, cout):
    return [make_conv(cin, cout, 3, 2, 1), make_conv(cout, cout, 3, 1, 1)]


def encoder_block_fwd(ps, x):
    for p in ps:
        x = conv2d(p, x, "leaky")
    return x


def make_standin_encoder():
    # TODO(synk): SEResNeXt_Origin / BottleneckX_Origin were not provided;
    # this stand-in only matches the output shapes the Generator requires.
    return dict(c1=make_conv(1, 64, 3, 2, 1),
                c2=make_conv(64, 256, 3, 1, 1),
                c3=make_conv(256, 512, 3, 2, 1),
                c4=make_conv(512, 1024, 3, 2, 1))


def standin_encoder_fwd(p, x):
    x1 = conv2d(p["c1"], x, "leaky")      # (B, H/2, W/2,   64)
    x2 = conv2d(p["c2"], x1, "leaky")     # (B, H/2, W/2,  256)
    x3 = conv2d(p["c3"], x2, "leaky")     # (B, H/4, W/4,  512)
    x4 = conv2d(p["c4"], x3, "leaky")     # (B, H/8, W/8, 1024)
    return x1, x2, x3, x4


def make_generator():
    P = {}
    P["to0"] = make_encoder_block_first(5, 32)
    P["to1"] = make_encoder_block(32, 64)
    P["to2"] = make_encoder_block(64, 92)
    P["to3"] = make_encoder_block(92, 128)
    P["encoder"] = make_standin_encoder()

    P["tunnel4_head"] = make_conv(1024 + 128, 512, 3, 1, 1)
    P["tunnel4_blocks"] = [make_bottleneck(512, 512, 32, 1) for _ in range(20)]
    P["tunnel4_tail"] = make_conv(512, 1024, 3, 1, 1)

    depth = 2
    cfg3 = ([(256, 256, 32, 1)] * depth + [(256, 256, 32, 2)] * depth +
            [(256, 256, 32, 4)] * depth + [(256, 256, 32, 2), (256, 256, 32, 1)])
    P["tunnel3_head"] = make_conv(512 + 256, 256, 3, 1, 1)
    P["tunnel3_blocks"] = [make_bottleneck(*a) for a in cfg3]
    P["tunnel3_tail"] = make_conv(256, 512, 3, 1, 1)

    cfg2 = ([(128, 128, 32, 1)] * depth + [(128, 128, 32, 2)] * depth +
            [(128, 128, 32, 4)] * depth + [(128, 128, 32, 2), (128, 128, 32, 1)])
    P["tunnel2_head"] = make_conv(128 + 256 + 64, 128, 3, 1, 1)
    P["tunnel2_blocks"] = [make_bottleneck(*a) for a in cfg2]
    P["tunnel2_tail"] = make_conv(128, 256, 3, 1, 1)

    P["exit1"] = make_conv(64 + 32, 32, 3, 1, 1)
    P["exit2"] = make_conv(32, 3, 1, 1, 0)

    P["deconv"] = [
        make_convT(256, 128, 3, 2, 1, 1),
        make_convT(128, 64, 3, 2, 1, 1),
        make_convT(64, 32, 3, 1, 1, 0),
        make_convT(32, 3, 3, 1, 1, 0),
    ]
    return P


def generator_fwd(P, sketch):                                    # sketch: NHWC
    x0 = encoder_block_fwd(P["to0"], sketch)                     # (B,H,W,32)
    aux = encoder_block_fwd(P["to1"], x0)                        # (B,H/2,.,64)
    aux = encoder_block_fwd(P["to2"], aux)                       # (B,H/4,.,92)
    aux = encoder_block_fwd(P["to3"], aux)                       # (B,H/8,.,128)
    x1, x2, x3, x4 = standin_encoder_fwd(P["encoder"], sketch[..., 0:1])

    out = conv2d(P["tunnel4_head"], jnp.concatenate([x4, aux], -1), "leaky")
    for bp in P["tunnel4_blocks"]:
        out = bottleneck_fwd(bp, out)
    # LeakyReLU commutes with PixelShuffle (elementwise vs permutation) -> fused into conv
    out = conv2d(P["tunnel4_tail"], out, "leaky")
    out = pixel_shuffle(out, 2)                                  # (B,H/4,.,256)

    x = conv2d(P["tunnel3_head"], jnp.concatenate([out, x3], -1), "leaky")
    for bp in P["tunnel3_blocks"]:
        x = bottleneck_fwd(bp, x)
    x = conv2d(P["tunnel3_tail"], x, "leaky")
    x = pixel_shuffle(x, 2)                                      # (B,H/2,.,128)

    x = conv2d(P["tunnel2_head"], jnp.concatenate([x, x2, x1], -1), "leaky")
    for bp in P["tunnel2_blocks"]:
        x = bottleneck_fwd(bp, x)
    x = conv2d(P["tunnel2_tail"], x, "leaky")
    x = pixel_shuffle(x, 2)                                      # (B,H,.,64)

    x = conv2d(P["exit1"], jnp.concatenate([x, x0], -1), "leaky")
    fake = conv2d(P["exit2"], x, "tanh")                         # tanh fused in epilogue

    d = conv_transpose2d(P["deconv"][0], out, "leaky")
    d = conv_transpose2d(P["deconv"][1], d, "leaky")
    d = conv_transpose2d(P["deconv"][2], d, "leaky")
    guide = conv_transpose2d(P["deconv"][3], d, "tanh")
    return fake, guide


def colorizer_fwd(P, x_nchw):
    x = jnp.transpose(x_nchw, (0, 2, 3, 1)).astype(jnp.float32)   # NCHW -> NHWC once
    fake, guide = generator_fwd(P, x)
    return (jnp.transpose(fake, (0, 3, 1, 2)),
            jnp.transpose(guide, (0, 3, 1, 2)))


if __name__ == "__main__":
    key = jax.random.PRNGKey(0)
    x = jax.random.normal(key, (2, 5, 16, 16), dtype=jnp.float32)

    params = make_generator()
    fake, guide = colorizer_fwd(params, x)
    jax.block_until_ready((fake, guide))

    assert fake.shape == (2, 3, 16, 16), fake.shape
    assert guide.shape == (2, 3, 16, 16), guide.shape
    assert bool(jnp.isfinite(fake).all()) and bool(jnp.isfinite(guide).all())
    print("KERNEL_OK")
</pallas_src>

<mosaic_0001>
module attributes {stable_mosaic.version = 11 : i64} {
  func.func @_mm_kernel(%arg0: i32, %arg1: i32, %arg2: i32, %arg3: memref<256x128xbf16, #tpu.memory_space<vmem>>, %arg4: memref<128x128xbf16, #tpu.memory_space<vmem>>, %arg5: memref<1x128xf32, #tpu.memory_space<vmem>>, %arg6: memref<256x128xf32, #tpu.memory_space<vmem>>) attributes {dimension_semantics = [#tpu.dimension_semantics<parallel>, #tpu.dimension_semantics<parallel>, #tpu.dimension_semantics<arbitrary>], iteration_bounds = array<i64: 2, 1, 1>, scalar_prefetch = 0 : i64, scratch_operands = 0 : i64, tpu.core_type = #tpu.core_type<tc>, window_params = [{transform_indices = @transform_0, window_bounds = array<i64: 256, 128>}, {transform_indices = @transform_1, window_bounds = array<i64: 128, 128>}, {transform_indices = @transform_2, window_bounds = array<i64: 1, 128>}, {transform_indices = @transform_3, window_bounds = array<i64: 256, 128>}]} {
    %c0_i32 = arith.constant 0 : i32
    %0 = arith.cmpi eq, %arg2, %c0_i32 : i32
    %1 = arith.extui %0 : i1 to i32
    %c0_i32_0 = arith.constant 0 : i32
    %2 = arith.cmpi ne, %1, %c0_i32_0 : i32
    scf.if %2 {
      %cst_10 = arith.constant 0.000000e+00 : f32
      %12 = vector.broadcast %cst_10 : f32 to vector<256x128xf32>
      %c0_11 = arith.constant 0 : index
      %c0_12 = arith.constant 0 : index
      %13 = vector.load %arg6[%c0_11, %c0_12] : memref<256x128xf32, #tpu.memory_space<vmem>>, vector<256x128xf32>
      tpu.vector_store %arg6[%c0_11, %c0_12], %12 {strides = array<i32>} : memref<256x128xf32, #tpu.memory_space<vmem>>, vector<256x128xf32>,
    } else {
    }
    %c0 = arith.constant 0 : index
    %c0_1 = arith.constant 0 : index
    %3 = vector.load %arg6[%c0, %c0_1] : memref<256x128xf32, #tpu.memory_space<vmem>>, vector<256x128xf32>
    %c0_2 = arith.constant 0 : index
    %c0_3 = arith.constant 0 : index
    %4 = vector.load %arg3[%c0_2, %c0_3] : memref<256x128xbf16, #tpu.memory_space<vmem>>, vector<256x128xbf16>
    %c0_4 = arith.constant 0 : index
    %c0_5 = arith.constant 0 : index
    %5 = vector.load %arg4[%c0_4, %c0_5] : memref<128x128xbf16, #tpu.memory_space<vmem>>, vector<128x128xbf16>
    %cst = arith.constant dense<0.000000e+00> : vector<256x128xf32>
    %6 = tpu.matmul %4, %5, %cst {dimension_numbers = #tpu.dot_dimension_numbers<[1], [0], [0], [1], [0, 0, 1, 1], [], []>} : vector<256x128xbf16>, vector<128x128xbf16>, vector<256x128xf32> -> vector<256x128xf32>
    %7 = arith.addf %3, %6 : vector<256x128xf32>
    %c0_6 = arith.constant 0 : index
    %c0_7 = arith.constant 0 : index
    %8 = vector.load %arg6[%c0_6, %c0_7] : memref<256x128xf32, #tpu.memory_space<vmem>>, vector<256x128xf32>
    tpu.vector_store %arg6[%c0_6, %c0_7], %7 {strides = array<i32>} : memref<256x128xf32, #tpu.memory_space<vmem>>, vector<256x128xf32>,
    %c0_i32_8 = arith.constant 0 : i32
    %9 = arith.cmpi eq, %arg2, %c0_i32_8 : i32
    %10 = arith.extui %9 : i1 to i32
    %c0_i32_9 = arith.constant 0 : i32
    %11 = arith.cmpi ne, %10, %c0_i32_9 : i32
    scf.if %11 {
      %c0_10 = arith.constant 0 : index
      %c0_11 = arith.constant 0 : index
      %12 = vector.load %arg6[%c0_10, %c0_11] : memref<256x128xf32, #tpu.memory_space<vmem>>, vector<256x128xf32>
      %c0_12 = arith.constant 0 : index
      %c0_13 = arith.constant 0 : index
      %13 = vector.load %arg5[%c0_12, %c0_13] : memref<1x128xf32, #tpu.memory_space<vmem>>, vector<1x128xf32>
      %14 = vector.broadcast %13 : vector<1x128xf32> to vector<256x128xf32>
      %15 = arith.addf %12, %14 : vector<256x128xf32>
      %cst_14 = arith.constant 0.000000e+00 : f32
      %16 = vector.broadcast %cst_14 : f32 to vector<256x128xf32>
      %17 = arith.cmpf ogt, %15, %16 : vector<256x128xf32>
      %cst_15 = arith.constant 2.000000e-01 : f32
      %18 = vector.broadcast %cst_15 : f32 to vector<256x128xf32>
      %19 = arith.mulf %18, %15 : vector<256x128xf32>
      %20 = arith.select %17, %15, %19 : vector<256x128xi1>, vector<256x128xf32>
      %c0_16 = arith.constant 0 : index
      %c0_17 = arith.constant 0 : index
      %21 = vector.load %arg6[%c0_16, %c0_17] : memref<256x128xf32, #tpu.memory_space<vmem>>, vector<256x128xf32>
      tpu.vector_store %arg6[%c0_16, %c0_17], %20 {strides = array<i32>} : memref<256x128xf32, #tpu.memory_space<vmem>>, vector<256x128xf32>,
    } else {
    }
    return
  }
  func.func @transform_0(%arg0: i32, %arg1: i32, %arg2: i32) -> (i32, i32) {
    %c0_i32 = arith.constant 0 : i32
    return %arg0, %arg2 : i32, i32
  }
  func.func @transform_1(%arg0: i32, %arg1: i32, %arg2: i32) -> (i32, i32) {
    %c0_i32 = arith.constant 0 : i32
    return %arg2, %arg1 : i32, i32
  }
  func.func @transform_2(%arg0: i32, %arg1: i32, %arg2: i32) -> (i32, i32) {
    %c0_i32 = arith.constant 0 : i32
    %c0_i32_0 = arith.constant 0 : i32
    return %c0_i32, %arg1 : i32, i32
  }
  func.func @transform_3(%arg0: i32, %arg1: i32, %arg2: i32) -> (i32, i32) {
    %c0_i32 = arith.constant 0 : i32
    return %arg0, %arg1 : i32, i32
  }
}

</mosaic_0001>

<llo_original>
// kernel: _conv2d_impl.1
$region0: #{_conv2d_impl.1}
  #allocation0 [shape = 'u32[]', space=smem, size = 0x4, offset = 0x4, fixed_abs, tag = 'smem constant byte address 0x4 - core index']
  #allocation1 [shape = 'u32[72,128]{1,0:T(1,128)}', space=vmem, size = 0x9000, scoped, tag = 'internal scratch']
  %s0 = inlined_call_operand.vmem [shape: bf16[512,128], index: 0, kind: input, shape index: {}]
  %s1 = inlined_call_operand.vmem [shape: bf16[128,128], index: 1, kind: input, shape index: {}]
  %s2 = inlined_call_operand.vmem [shape: f32[1,128], index: 2, kind: input, shape index: {}]
  %s3 = inlined_call_operand.hbm [shape: f32[512,128], index: 3, kind: output, shape index: {}]
  %s4 = sld [smem:[#allocation0]]
  $region53: #{_conv2d_impl.1} parent=0
    _
  %s6 = ssub.s32 1, %s4
  %s7 = scalar_select 0, %s6, %s4
  $region1: #{_conv2d_impl.1} parent=0
    #allocation2 [shape = 'u8[262144]{0}', space=vmem, size = 0x40000, scoped, tag = 'output window, operand 0']
    #allocation3 [shape = 's32[2]{0}', space=sflag, size = 0x8, scoped, tag = 'scoped memory for _conv2d_impl.1']
    %8 = vsyncpa [#allocation3], 0
    %s9 = scalar_lea.sflag [#allocation3], 1
    %10 = vsyncpa %s9, 0
    loop: start=0, step=1, limit=4
    $region2: #{_conv2d_impl.1} parent=1 // loop_pre_header
      _
    $region3: #{_conv2d_impl.1} parent=1 // loop_header
      %s12 = sphi 0, %s16
      %p13 = scmp.ge.s32.totalorder %s12, 4
      %s19 = sphi 0, %s38
      %s20 = sphi 0, %s34
      %s21 = sphi 0, %s30
      %s22 = sphi 0, %s19
      %s23 = sphi 0, %s20
      %s24 = sphi 0, %s21
      %s25 = sphi 0, %s22
      %s26 = sphi 0, %s23
      %s27 = sphi 0, %s24
      %s43 = sphi 0, %s45
      %s46 = sphi 0, %s43
      %s47 = sphi 0, %s46
      %s63 = sphi 0, %s47
      %s71 = sphi 0, %s73
      %s74 = sphi 0, %s71
      %s75 = sphi 0, %s74
      %s91 = sphi 0, %s75
      %s97 = sphi 0, %s99
      %s100 = sphi 0, %s97
      %s101 = sphi 0, %s100
      %s117 = sphi 0, %s101
      %s125 = sphi 0, %s127
      %s128 = sphi 0, %s125
      %s129 = sphi 0, %s128
      %s145 = sphi 0, %s129
    $region4: #{_conv2d_impl.1} parent=1 // loop_header_branch
      %15 = sbr.rel (%p13) target = $region8
    $region5: #{_conv2d_impl.1} parent=1 // loop_body
      %s17 = ssub.s32 %s12, 1
      %s18 = ssub.s32 %s12, 2
      %s28 = sadd.s32 1, %s21
      %p29 = scmp.ge.s32.totalorder %s28, 1
      %s30 = scalar_select %p29, 0, %s28
      %s31 = sadd.s32 1, %s20
      %s32 = scalar_select %p29, %s31, %s20
      %p33 = scmp.ge.s32.totalorder %s32, 1
      %s34 = scalar_select %p33, 0, %s32
      %s35 = sadd.s32 1, %s19
      %s36 = scalar_select %p33, %s35, %s19
      %p37 = scmp.ge.s32.totalorder %s36, 2
      %s38 = scalar_select %p37, 0, %s36
      %s39 = ssub.s32 %s19, %s38
      %s40 = ssub.s32 %s21, %s30
      %s41 = sor.u32 %s39, %s40
      %p42 = scmp.eq.s32.totalorder %s41, 0
      %s44 = sadd.s32 %s43, 1
      %s45 = scalar_select %p42, %s43, %s44
      %p48 = pneg %p42
      %p49 = scmp.eq.s32.totalorder %s12, 1
      %p50 = por %p48, %p49
      %p51 = scmp.ne.s32.totalorder %s43, %s46
      %p52 = scmp.eq.s32.totalorder %s12, 0
      %p53 = por %p51, %p52
      %p54 = scmp.ne.s32.totalorder %s43, %s46
      %p55 = scmp.eq.s32.totalorder %s17, 1
      %p56 = por %p54, %p55
      %p57 = scmp.ne.s32.totalorder %s46, %s47
      %p58 = scmp.eq.s32.totalorder %s17, 0
      %p59 = por %p57, %p58
      %p60 = scmp.ne.s32.totalorder %s46, %s47
      %p61 = scmp.eq.s32.totalorder %s18, 1
      %p62 = por %p60, %p61
      %p64 = scmp.ne.s32.totalorder %s47, %s63
      %p65 = scmp.eq.s32.totalorder %s18, 0
      %p66 = por %p64, %p65
      %s67 = ssub.s32 %s21, %s30
      %s68 = ssub.s32 %s20, %s34
      %s69 = sor.u32 %s67, %s68
      %p70 = scmp.eq.s32.totalorder %s69, 0
      %s72 = sadd.s32 %s71, 1
      %s73 = scalar_select %p70, %s71, %s72
      %p76 = pneg %p70
      %p77 = scmp.eq.s32.totalorder %s12, 1
      %p78 = por %p76, %p77
      %p79 = scmp.ne.s32.totalorder %s71, %s74
      %p80 = scmp.eq.s32.totalorder %s12, 0
      %p81 = por %p79, %p80
      %p82 = scmp.ne.s32.totalorder %s71, %s74
      %p83 = scmp.eq.s32.totalorder %s17, 1
      %p84 = por %p82, %p83
      %p85 = scmp.ne.s32.totalorder %s74, %s75
      %p86 = scmp.eq.s32.totalorder %s17, 0
      %p87 = por %p85, %p86
      %p88 = scmp.ne.s32.totalorder %s74, %s75
      %p89 = scmp.eq.s32.totalorder %s18, 1
      %p90 = por %p88, %p89
      %p92 = scmp.ne.s32.totalorder %s75, %s91
      %p93 = scmp.eq.s32.totalorder %s18, 0
      %p94 = por %p92, %p93
      %s95 = ssub.s32 %s20, %s34
      %p96 = scmp.eq.s32.totalorder %s95, 0
      %s98 = sadd.s32 %s97, 1
      %s99 = scalar_select %p96, %s97, %s98
      %p102 = pneg %p96
      %p103 = scmp.eq.s32.totalorder %s12, 1
      %p104 = por %p102, %p103
      %p105 = scmp.ne.s32.totalorder %s97, %s100
      %p106 = scmp.eq.s32.totalorder %s12, 0
      %p107 = por %p105, %p106
      %p108 = scmp.ne.s32.totalorder %s97, %s100
      %p109 = scmp.eq.s32.totalorder %s17, 1
      %p110 = por %p108, %p109
      %p111 = scmp.ne.s32.totalorder %s100, %s101
      %p112 = scmp.eq.s32.totalorder %s17, 0
      %p113 = por %p111, %p112
      %p114 = scmp.ne.s32.totalorder %s100, %s101
      %p115 = scmp.eq.s32.totalorder %s18, 1
      %p116 = por %p114, %p115
      %p118 = scmp.ne.s32.totalorder %s101, %s117
      %p119 = scmp.eq.s32.totalorder %s18, 0
      %p120 = por %p118, %p119
      %s121 = ssub.s32 %s19, %s38
      %s122 = ssub.s32 %s20, %s34
      %s123 = sor.u32 %s121, %s122
      %p124 = scmp.eq.s32.totalorder %s123, 0
      %s126 = sadd.s32 %s125, 1
      %s127 = scalar_select %p124, %s125, %s126
      %p130 = pneg %p124
      %p131 = scmp.eq.s32.totalorder %s12, 1
      %p132 = por %p130, %p131
      %p133 = scmp.ne.s32.totalorder %s125, %s128
      %p134 = scmp.eq.s32.totalorder %s12, 0
      %p135 = por %p133, %p134
      %p136 = scmp.ne.s32.totalorder %s125, %s128
      %p137 = scmp.eq.s32.totalorder %s17, 1
      %p138 = por %p136, %p137
      %p139 = scmp.ne.s32.totalorder %s128, %s129
      %p140 = scmp.eq.s32.totalorder %s17, 0
      %p141 = por %p139, %p140
      %p142 = scmp.ne.s32.totalorder %s128, %s129
      %p143 = scmp.eq.s32.totalorder %s18, 1
      %p144 = por %p142, %p143
      %p146 = scmp.ne.s32.totalorder %s129, %s145
      %p147 = scmp.eq.s32.totalorder %s18, 0
      %p148 = por %p146, %p147
      %p149 = scmp.le.s32.totalorder 1, %s12
      %p150 = scmp.lt.s32.totalorder %s12, 3
      %p151 = pnand %p149, %p150
      %p152 = pneg %p151
      // Predicated region
      $region9: #{_conv2d_impl.1} parent=5 // pred_check
        _
      $region10: #{_conv2d_impl.1} parent=5 // pred_check_branch
        %154 = sbr.rel (%p151) target = $region12
      $region11: #{_conv2d_impl.1} parent=5 // pred_region
        %s155 = ssub.s32 %s12, 1
        // Predicated region
        $region13: #{_conv2d_impl.1} parent=11 // pred_check
          %p156 = pneg %p87
        $region14: #{_conv2d_impl.1} parent=11 // pred_check_branch
          %158 = sbr.rel (%p156) target = $region16
        $region15: #{_conv2d_impl.1} parent=11 // pred_region
          %s159 = smul.u32 16, %s24
          %p160 = scmp.lt.s32.totalorder %s159, 15
          %s161 = scalar_select %p160, %s159, 15
          %p162 = scmp.lt.s32.totalorder %s23, 0
          %s163 = scalar_select %p162, %s23, 0
          %s164 = sadd.s32 %s163, %s161
          %s165 = smul.addr %s164, 4
          %s166 = scalar_lea.vmem %s1, %s165
          %s167 = smul.u32 16, %s24
        $region16: #{_conv2d_impl.1} parent=11 // pred_fallthru
          _
        // Predicated region
        $region17: #{_conv2d_impl.1} parent=11 // pred_check
          %p168 = pneg %p113
        $region18: #{_conv2d_impl.1} parent=11 // pred_check_branch
          %170 = sbr.rel (%p168) target = $region20
        $region19: #{_conv2d_impl.1} parent=11 // pred_region
          %p171 = scmp.lt.s32.totalorder %s23, 0
          %s172 = scalar_select %p171, %s23, 0
          %s173 = scalar_lea.vmem %s2, %s172
        $region20: #{_conv2d_impl.1} parent=11 // pred_fallthru
          _
      $region12: #{_conv2d_impl.1} parent=5 // pred_fallthru
        _
      %p174 = scmp.lt.s32.totalorder %s12, 2
      // Predicated region
      $region21: #{_conv2d_impl.1} parent=5 // pred_check
        %p175 = pneg %p174
      $region22: #{_conv2d_impl.1} parent=5 // pred_check_branch
        %177 = sbr.rel (%p175) target = $region24
      $region23: #{_conv2d_impl.1} parent=5 // pred_region
        // Predicated region
        $region25: #{_conv2d_impl.1} parent=23 // pred_check
          %p178 = pneg %p53
        $region26: #{_conv2d_impl.1} parent=23 // pred_check_branch
          %180 = sbr.rel (%p178) target = $region28
        $region27: #{_conv2d_impl.1} parent=23 // pred_region
          %s181 = smul.u32 32, %s19
          %p182 = scmp.lt.s32.totalorder %s181, 63
          %s183 = scalar_select %p182, %s181, 63
          %p184 = scmp.lt.s32.totalorder %s21, 0
          %s185 = scalar_select %p184, %s21, 0
          %s186 = sadd.s32 %s185, %s183
          %s187 = smul.addr %s186, 4
          %s188 = scalar_lea.vmem %s0, %s187
          %s189 = smul.u32 32, %s19
        $region28: #{_conv2d_impl.1} parent=23 // pred_fallthru
          _
      $region24: #{_conv2d_impl.1} parent=5 // pred_fallthru
        _
      %p190 = scmp.le.s32.totalorder 1, %s12
      %p191 = scmp.lt.s32.totalorder %s12, 3
      %p192 = pnand %p190, %p191
      %p193 = pneg %p192
      // Predicated region
      $region29: #{_conv2d_impl.1} parent=5 // pred_check
        _
      $region30: #{_conv2d_impl.1} parent=5 // pred_check_branch
        %195 = sbr.rel (%p192) target = $region32
      $region31: #{_conv2d_impl.1} parent=5 // pred_region
        %s196 = ssub.s32 %s12, 1
        %s197 = smul.u32 32, %s22
        %p198 = scmp.lt.s32.totalorder %s197, 63
        %s199 = scalar_select %p198, %s197, 63
        %p200 = scmp.lt.s32.totalorder %s24, 0
        %s201 = scalar_select %p200, %s24, 0
        %s202 = sadd.s32 %s201, %s199
        %s203 = smul.addr %s202, 4
        %s204 = scalar_lea.vmem %s0, %s203
        %p205 = pneg %p59
        %p206 = pneg %p56
        %s207 = smul.u32 16, %s24
        %p208 = scmp.lt.s32.totalorder %s207, 15
        %s209 = scalar_select %p208, %s207, 15
        %p210 = scmp.lt.s32.totalorder %s23, 0
        %s211 = scalar_select %p210, %s23, 0
        %s212 = sadd.s32 %s211, %s209
        %s213 = smul.addr %s212, 4
        %s214 = scalar_lea.vmem %s1, %s213
        %p215 = pneg %p87
        %p216 = pneg %p84
        %p217 = scmp.lt.s32.totalorder %s23, 0
        %s218 = scalar_select %p217, %s23, 0
        %s219 = scalar_lea.vmem %s2, %s218
        %p220 = pneg %p113
        %p221 = pneg %p110
        %p222 = pneg %p141
        %p223 = pneg %p138
        %s224 = sand.u32 %s128, 1
        %s225 = scalar_lea.sflag [#allocation3], %s224
        %s226 = sand.u32 %s128, 1
        %s227 = smul.addr %s226, 256
        %s228 = scalar_lea.vmem [#allocation2], %s227
        %s229 = smul.u32 32, %s22
        %p230 = scmp.lt.s32.totalorder %s229, 63
        %s231 = scalar_select %p230, %s229, 63
        %p232 = scmp.lt.s32.totalorder %s24, 0
        %s233 = scalar_select %p232, %s24, 0
        %s234 = sadd.s32 %s233, %s231
        %s235 = smul.addr %s234, 4
        %s236 = scalar_lea.vmem %s0, %s235
        %s237 = smul.u32 32, %s22
        %s238 = smul.u32 16, %s24
        %p239 = scmp.lt.s32.totalorder %s238, 15
        %s240 = scalar_select %p239, %s238, 15
        %p241 = scmp.lt.s32.totalorder %s23, 0
        %s242 = scalar_select %p241, %s23, 0
        %s243 = sadd.s32 %s242, %s240
        %s244 = smul.addr %s243, 4
        %s245 = scalar_lea.vmem %s1, %s244
        %s246 = smul.u32 16, %s24
        %p247 = scmp.lt.s32.totalorder %s23, 0
        %s248 = scalar_select %p247, %s23, 0
        %s249 = scalar_lea.vmem %s2, %s248
        %s250 = smul.u32 32, %s22
        %p251 = scmp.eq.s32.totalorder %s24, 0
        // Predicated region
        $region33: #{_conv2d_impl.1} parent=31 // pred_check
          %p252 = pneg %p251
        $region34: #{_conv2d_impl.1} parent=31 // pred_check_branch
          %254 = sbr.rel (%p252) target = $region36
        $region35: #{_conv2d_impl.1} parent=31 // pred_region
          %255 = vst [vmem:[%s228] sm:$0xff] 0.0
          %256 = vst [vmem:[%s228 + $0x8] sm:$0xff] 0.0
          %257 = vst [vmem:[%s228 + $0x10] sm:$0xff] 0.0
          %258 = vst [vmem:[%s228 + $0x18] sm:$0xff] 0.0
          %259 = vst [vmem:[%s228 + $0x20] sm:$0xff] 0.0
          %260 = vst [vmem:[%s228 + $0x28] sm:$0xff] 0.0
          %261 = vst [vmem:[%s228 + $0x30] sm:$0xff] 0.0
          %262 = vst [vmem:[%s228 + $0x38] sm:$0xff] 0.0
          %263 = vst [vmem:[%s228 + $0x40] sm:$0xff] 0.0
          %264 = vst [vmem:[%s228 + $0x48] sm:$0xff] 0.0
          %265 = vst [vmem:[%s228 + $0x50] sm:$0xff] 0.0
          %266 = vst [vmem:[%s228 + $0x58] sm:$0xff] 0.0
          %267 = vst [vmem:[%s228 + $0x60] sm:$0xff] 0.0
          %268 = vst [vmem:[%s228 + $0x68] sm:$0xff] 0.0
          %269 = vst [vmem:[%s228 + $0x70] sm:$0xff] 0.0
          %270 = vst [vmem:[%s228 + $0x78] sm:$0xff] 0.0
          %271 = vst [vmem:[%s228 + $0x80] sm:$0xff] 0.0
          %272 = vst [vmem:[%s228 + $0x88] sm:$0xff] 0.0
          %273 = vst [vmem:[%s228 + $0x90] sm:$0xff] 0.0
          %274 = vst [vmem:[%s228 + $0x98] sm:$0xff] 0.0
          %275 = vst [vmem:[%s228 + $0xa0] sm:$0xff] 0.0
          %276 = vst [vmem:[%s228 + $0xa8] sm:$0xff] 0.0
          %277 = vst [vmem:[%s228 + $0xb0] sm:$0xff] 0.0
          %278 = vst [vmem:[%s228 + $0xb8] sm:$0xff] 0.0
          %279 = vst [vmem:[%s228 + $0xc0] sm:$0xff] 0.0
          %280 = vst [vmem:[%s228 + $0xc8] sm:$0xff] 0.0
          %281 = vst [vmem:[%s228 + $0xd0] sm:$0xff] 0.0
          %282 = vst [vmem:[%s228 + $0xd8] sm:$0xff] 0.0
          %283 = vst [vmem:[%s228 + $0xe0] sm:$0xff] 0.0
          %284 = vst [vmem:[%s228 + $0xe8] sm:$0xff] 0.0
          %285 = vst [vmem:[%s228 + $0xf0] sm:$0xff] 0.0
          %286 = vst [vmem:[%s228 + $0xf8] sm:$0xff] 0.0
        $region36: #{_conv2d_impl.1} parent=31 // pred_fallthru
          _
        %v287 = vld [vmem:[%s228] sm:$0xff]
        %v288 = vld [vmem:[%s228 + $0x8] sm:$0xff]
        %v289 = vld [vmem:[%s228 + $0x10] sm:$0xff]
        %v290 = vld [vmem:[%s228 + $0x18] sm:$0xff]
        %v291 = vld [vmem:[%s228 + $0x20] sm:$0xff]
        %v292 = vld [vmem:[%s228 + $0x28] sm:$0xff]
        %v293 = vld [vmem:[%s228 + $0x30] sm:$0xff]
        %v294 = vld [vmem:[%s228 + $0x38] sm:$0xff]
        %v295 = vld [vmem:[%s228 + $0x40] sm:$0xff]
        %v296 = vld [vmem:[%s228 + $0x48] sm:$0xff]
        %v297 = vld [vmem:[%s228 + $0x50] sm:$0xff]
        %v298 = vld [vmem:[%s228 + $0x58] sm:$0xff]
        %v299 = vld [vmem:[%s228 + $0x60] sm:$0xff]
        %v300 = vld [vmem:[%s228 + $0x68] sm:$0xff]
        %v301 = vld [vmem:[%s228 + $0x70] sm:$0xff]
        %v302 = vld [vmem:[%s228 + $0x78] sm:$0xff]
        %v303 = vld [vmem:[%s228 + $0x80] sm:$0xff]
        %v304 = vld [vmem:[%s228 + $0x88] sm:$0xff]
        %v305 = vld [vmem:[%s228 + $0x90] sm:$0xff]
        %v306 = vld [vmem:[%s228 + $0x98] sm:$0xff]
        %v307 = vld [vmem:[%s228 + $0xa0] sm:$0xff]
        %v308 = vld [vmem:[%s228 + $0xa8] sm:$0xff]
        %v309 = vld [vmem:[%s228 + $0xb0] sm:$0xff]
        %v310 = vld [vmem:[%s228 + $0xb8] sm:$0xff]
        %v311 = vld [vmem:[%s228 + $0xc0] sm:$0xff]
        %v312 = vld [vmem:[%s228 + $0xc8] sm:$0xff]
        %v313 = vld [vmem:[%s228 + $0xd0] sm:$0xff]
        %v314 = vld [vmem:[%s228 + $0xd8] sm:$0xff]
        %v315 = vld [vmem:[%s228 + $0xe0] sm:$0xff]
        %v316 = vld [vmem:[%s228 + $0xe8] sm:$0xff]
        %v317 = vld [vmem:[%s228 + $0xf0] sm:$0xff]
        %v318 = vld [vmem:[%s228 + $0xf8] sm:$0xff]
        %v319 = vld [vmem:[%s236] sm:$0xf]
        %v320 = vld [vmem:[%s236 + $0x4] sm:$0xf]
        %v321 = vld [vmem:[%s236 + $0x8] sm:$0xf]
        %v322 = vld [vmem:[%s236 + $0xc] sm:$0xf]
        %v323 = vld [vmem:[%s236 + $0x10] sm:$0xf]
        %v324 = vld [vmem:[%s236 + $0x14] sm:$0xf]
        %v325 = vld [vmem:[%s236 + $0x18] sm:$0xf]
        %v326 = vld [vmem:[%s236 + $0x1c] sm:$0xf]
        %v327 = vld [vmem:[%s236 + $0x20] sm:$0xf]
        %v328 = vld [vmem:[%s236 + $0x24] sm:$0xf]
        %v329 = vld [vmem:[%s236 + $0x28] sm:$0xf]
        %v330 = vld [vmem:[%s236 + $0x2c] sm:$0xf]
        %v331 = vld [vmem:[%s236 + $0x30] sm:$0xf]
        %v332 = vld [vmem:[%s236 + $0x34] sm:$0xf]
        %v333 = vld [vmem:[%s236 + $0x38] sm:$0xf]
        %v334 = vld [vmem:[%s236 + $0x3c] sm:$0xf]
        %v335 = vld [vmem:[%s236 + $0x40] sm:$0xf]
        %v336 = vld [vmem:[%s236 + $0x44] sm:$0xf]
        %v337 = vld [vmem:[%s236 + $0x48] sm:$0xf]
        %v338 = vld [vmem:[%s236 + $0x4c] sm:$0xf]
        %v339 = vld [vmem:[%s236 + $0x50] sm:$0xf]
        %v340 = vld [vmem:[%s236 + $0x54] sm:$0xf]
        %v341 = vld [vmem:[%s236 + $0x58] sm:$0xf]
        %v342 = vld [vmem:[%s236 + $0x5c] sm:$0xf]
        %v343 = vld [vmem:[%s236 + $0x60] sm:$0xf]
        %v344 = vld [vmem:[%s236 + $0x64] sm:$0xf]
        %v345 = vld [vmem:[%s236 + $0x68] sm:$0xf]
        %v346 = vld [vmem:[%s236 + $0x6c] sm:$0xf]
        %v347 = vld [vmem:[%s236 + $0x70] sm:$0xf]
        %v348 = vld [vmem:[%s236 + $0x74] sm:$0xf]
        %v349 = vld [vmem:[%s236 + $0x78] sm:$0xf]
        %v350 = vld [vmem:[%s236 + $0x7c] sm:$0xf]
        %v351 = vld [vmem:[%s245] sm:$0xf]
        %v352 = vld [vmem:[%s245 + $0x4] sm:$0xf]
        %v353 = vld [vmem:[%s245 + $0x8] sm:$0xf]
        %v354 = vld [vmem:[%s245 + $0xc] sm:$0xf]
        %v355 = vld [vmem:[%s245 + $0x10] sm:$0xf]
        %v356 = vld [vmem:[%s245 + $0x14] sm:$0xf]
        %v357 = vld [vmem:[%s245 + $0x18] sm:$0xf]
        %v358 = vld [vmem:[%s245 + $0x1c] sm:$0xf]
        %v359 = vld [vmem:[%s245 + $0x20] sm:$0xf]
        %v360 = vld [vmem:[%s245 + $0x24] sm:$0xf]
        %v361 = vld [vmem:[%s245 + $0x28] sm:$0xf]
        %v362 = vld [vmem:[%s245 + $0x2c] sm:$0xf]
        %v363 = vld [vmem:[%s245 + $0x30] sm:$0xf]
        %v364 = vld [vmem:[%s245 + $0x34] sm:$0xf]
        %v365 = vld [vmem:[%s245 + $0x38] sm:$0xf]
        %v366 = vld [vmem:[%s245 + $0x3c] sm:$0xf]
        %v399 = vunpack.c.l.b16 %v319
        %v400 = vunpack.c.l.b16 %v320
        %v401 = vunpack.c.l.b16 %v321
        %v402 = vunpack.c.l.b16 %v322
        %v403 = vunpack.c.l.b16 %v323
        %v404 = vunpack.c.l.b16 %v324
        %v405 = vunpack.c.l.b16 %v325
        %v406 = vunpack.c.l.b16 %v326
        %v407 = vunpack.c.l.b16 %v327
        %v408 = vunpack.c.l.b16 %v328
        %v409 = vunpack.c.l.b16 %v329
        %v410 = vunpack.c.l.b16 %v330
        %v411 = vunpack.c.l.b16 %v331
        %v412 = vunpack.c.l.b16 %v332
        %v413 = vunpack.c.l.b16 %v333
        %v414 = vunpack.c.l.b16 %v334
        %v415 = vunpack.c.l.b16 %v335
        %v416 = vunpack.c.l.b16 %v336
        %v417 = vunpack.c.l.b16 %v337
        %v418 = vunpack.c.l.b16 %v338
        %v419 = vunpack.c.l.b16 %v339
        %v420 = vunpack.c.l.b16 %v340
        %v421 = vunpack.c.l.b16 %v341
        %v422 = vunpack.c.l.b16 %v342
        %v423 = vunpack.c.l.b16 %v343
        %v424 = vunpack.c.l.b16 %v344
        %v425 = vunpack.c.l.b16 %v345
        %v426 = vunpack.c.l.b16 %v346
        %v427 = vunpack.c.l.b16 %v347
        %v428 = vunpack.c.l.b16 %v348
        %v429 = vunpack.c.l.b16 %v349
        %v430 = vunpack.c.l.b16 %v350
        %v431 = vpack.c.b16 %v400, %v399
        %v432 = vpack.c.b16 %v402, %v401
        %v433 = vpack.c.b16 %v404, %v403
        %v434 = vpack.c.b16 %v406, %v405
        %v435 = vpack.c.b16 %v408, %v407
        %v436 = vpack.c.b16 %v410, %v409
        %v437 = vpack.c.b16 %v412, %v411
        %v438 = vpack.c.b16 %v414, %v413
        %v439 = vpack.c.b16 %v416, %v415
        %v440 = vpack.c.b16 %v418, %v417
        %v441 = vpack.c.b16 %v420, %v419
        %v442 = vpack.c.b16 %v422, %v421
        %v443 = vpack.c.b16 %v424, %v423
        %v444 = vpack.c.b16 %v426, %v425
        %v445 = vpack.c.b16 %v428, %v427
        %v446 = vpack.c.b16 %v430, %v429
        %v479 = vunpack.c.l.b16 %v351
        %v480 = vunpack.c.l.b16 %v352
        %v481 = vunpack.c.l.b16 %v353
        %v482 = vunpack.c.l.b16 %v354
        %v483 = vunpack.c.l.b16 %v355
        %v484 = vunpack.c.l.b16 %v356
        %v485 = vunpack.c.l.b16 %v357
        %v486 = vunpack.c.l.b16 %v358
        %v487 = vunpack.c.l.b16 %v359
        %v488 = vunpack.c.l.b16 %v360
        %v489 = vunpack.c.l.b16 %v361
        %v490 = vunpack.c.l.b16 %v362
        %v491 = vunpack.c.l.b16 %v363
        %v492 = vunpack.c.l.b16 %v364
        %v493 = vunpack.c.l.b16 %v365
        %v494 = vunpack.c.l.b16 %v366
        %v495 = vpack.c.b16 %v480, %v479
        %v496 = vpack.c.b16 %v482, %v481
        %v497 = vpack.c.b16 %v484, %v483
        %v498 = vpack.c.b16 %v486, %v485
        %v499 = vpack.c.b16 %v488, %v487
        %v500 = vpack.c.b16 %v490, %v489
        %v501 = vpack.c.b16 %v492, %v491
        %v502 = vpack.c.b16 %v494, %v493
        %511 = vmatpush.bf16.msra.mxu0 %v502
        %512 = vmatpush.bf16.msra.mxu0 %v501
        %513 = vmatpush.bf16.msra.mxu0 %v500
        %514 = vmatpush.bf16.msra.mxu0 %v499
        %515 = vmatpush.bf16.msra.mxu0 %v498
        %516 = vmatpush.bf16.msra.mxu0 %v497
        %517 = vmatpush.bf16.msra.mxu0 %v496
        %518 = vmatpush.bf16.msra.mxu0 %v495
        %519 = vmatmul.bf16.gmra.mxu0 %v431
        %v520 = vpop.f32.mrf.mxu0
        %v521 = vadd.f32 0.0, %v520
        %v522 = vpop.f32.mrf.mxu0
        %v523 = vadd.f32 0.0, %v522
        %524 = vmatmul.bf16.gmra.mxu0 %v432
        %v525 = vpop.f32.mrf.mxu0
        %v526 = vadd.f32 0.0, %v525
        %v527 = vpop.f32.mrf.mxu0
        %v528 = vadd.f32 0.0, %v527
        %529 = vmatmul.bf16.gmra.mxu0 %v433
        %v530 = vpop.f32.mrf.mxu0
        %v531 = vadd.f32 0.0, %v530
        %v532 = vpop.f32.mrf.mxu0
        %v533 = vadd.f32 0.0, %v532
        %534 = vmatmul.bf16.gmra.mxu0 %v434
        %v535 = vpop.f32.mrf.mxu0
        %v536 = vadd.f32 0.0, %v535
        %v537 = vpop.f32.mrf.mxu0
        %v538 = vadd.f32 0.0, %v537
        %539 = vmatmul.bf16.gmra.mxu0 %v435
        %v540 = vpop.f32.mrf.mxu0
        %v541 = vadd.f32 0.0, %v540
        %v542 = vpop.f32.mrf.mxu0
        %v543 = vadd.f32 0.0, %v542
        %544 = vmatmul.bf16.gmra.mxu0 %v436
        %v545 = vpop.f32.mrf.mxu0
        %v546 = vadd.f32 0.0, %v545
        %v547 = vpop.f32.mrf.mxu0
        %v548 = vadd.f32 0.0, %v547
        %549 = vmatmul.bf16.gmra.mxu0 %v437
        %v550 = vpop.f32.mrf.mxu0
        %v551 = vadd.f32 0.0, %v550
        %v552 = vpop.f32.mrf.mxu0
        %v553 = vadd.f32 0.0, %v552
        %554 = vmatmul.bf16.gmra.mxu0 %v438
        %v555 = vpop.f32.mrf.mxu0
        %v556 = vadd.f32 0.0, %v555
        %v557 = vpop.f32.mrf.mxu0
        %v558 = vadd.f32 0.0, %v557
        %559 = vmatmul.bf16.gmra.mxu0 %v439
        %v560 = vpop.f32.mrf.mxu0
        %v561 = vadd.f32 0.0, %v560
        %v562 = vpop.f32.mrf.mxu0
        %v563 = vadd.f32 0.0, %v562
        %564 = vmatmul.bf16.gmra.mxu0 %v440
        %v565 = vpop.f32.mrf.mxu0
        %v566 = vadd.f32 0.0, %v565
        %v567 = vpop.f32.mrf.mxu0
        %v568 = vadd.f32 0.0, %v567
        %569 = vmatmul.bf16.gmra.mxu0 %v441
        %v570 = vpop.f32.mrf.mxu0
        %v571 = vadd.f32 0.0, %v570
        %v572 = vpop.f32.mrf.mxu0
        %v573 = vadd.f32 0.0, %v572
        %574 = vmatmul.bf16.gmra.mxu0 %v442
        %v575 = vpop.f32.mrf.mxu0
        %v576 = vadd.f32 0.0, %v575
        %v577 = vpop.f32.mrf.mxu0
        %v578 = vadd.f32 0.0, %v577
        %579 = vmatmul.bf16.gmra.mxu0 %v443
        %v580 = vpop.f32.mrf.mxu0
        %v581 = vadd.f32 0.0, %v580
        %v582 = vpop.f32.mrf.mxu0
        %v583 = vadd.f32 0.0, %v582
        %584 = vmatmul.bf16.gmra.mxu0 %v444
        %v585 = vpop.f32.mrf.mxu0
        %v586 = vadd.f32 0.0, %v585
        %v587 = vpop.f32.mrf.mxu0
        %v588 = vadd.f32 0.0, %v587
        %589 = vmatmul.bf16.gmra.mxu0 %v445
        %v590 = vpop.f32.mrf.mxu0
        %v591 = vadd.f32 0.0, %v590
        %v592 = vpop.f32.mrf.mxu0
        %v593 = vadd.f32 0.0, %v592
        %594 = vmatmul.bf16.gmra.mxu0 %v446
        %v595 = vpop.f32.mrf.mxu0
        %v596 = vadd.f32 0.0, %v595
        %v597 = vpop.f32.mrf.mxu0
        %v598 = vadd.f32 0.0, %v597
        %599 = vdwg.mxu0
        %v600 = vadd.f32 %v287, %v521
        %v601 = vadd.f32 %v288, %v523
        %v602 = vadd.f32 %v289, %v526
        %v603 = vadd.f32 %v290, %v528
        %v604 = vadd.f32 %v291, %v531
        %v605 = vadd.f32 %v292, %v533
        %v606 = vadd.f32 %v293, %v536
        %v607 = vadd.f32 %v294, %v538
        %v608 = vadd.f32 %v295, %v541
        %v609 = vadd.f32 %v296, %v543
        %v610 = vadd.f32 %v297, %v546
        %v611 = vadd.f32 %v298, %v548
        %v612 = vadd.f32 %v299, %v551
        %v613 = vadd.f32 %v300, %v553
        %v614 = vadd.f32 %v301, %v556
        %v615 = vadd.f32 %v302, %v558
        %v616 = vadd.f32 %v303, %v561
        %v617 = vadd.f32 %v304, %v563
        %v618 = vadd.f32 %v305, %v566
        %v619 = vadd.f32 %v306, %v568
        %v620 = vadd.f32 %v307, %v571
        %v621 = vadd.f32 %v308, %v573
        %v622 = vadd.f32 %v309, %v576
        %v623 = vadd.f32 %v310, %v578
        %v624 = vadd.f32 %v311, %v581
        %v625 = vadd.f32 %v312, %v583
        %v626 = vadd.f32 %v313, %v586
        %v627 = vadd.f32 %v314, %v588
        %v628 = vadd.f32 %v315, %v591
        %v629 = vadd.f32 %v316, %v593
        %v630 = vadd.f32 %v317, %v596
        %v631 = vadd.f32 %v318, %v598
        %632 = vst [vmem:[%s228] sm:$0xff] %v600
        %633 = vst [vmem:[%s228 + $0x8] sm:$0xff] %v601
        %634 = vst [vmem:[%s228 + $0x10] sm:$0xff] %v602
        %635 = vst [vmem:[%s228 + $0x18] sm:$0xff] %v603
        %636 = vst [vmem:[%s228 + $0x20] sm:$0xff] %v604
        %637 = vst [vmem:[%s228 + $0x28] sm:$0xff] %v605
        %638 = vst [vmem:[%s228 + $0x30] sm:$0xff] %v606
        %639 = vst [vmem:[%s228 + $0x38] sm:$0xff] %v607
        %640 = vst [vmem:[%s228 + $0x40] sm:$0xff] %v608
        %641 = vst [vmem:[%s228 + $0x48] sm:$0xff] %v609
        %642 = vst [vmem:[%s228 + $0x50] sm:$0xff] %v610
        %643 = vst [vmem:[%s228 + $0x58] sm:$0xff] %v611
        %644 = vst [vmem:[%s228 + $0x60] sm:$0xff] %v612
        %645 = vst [vmem:[%s228 + $0x68] sm:$0xff] %v613
        %646 = vst [vmem:[%s228 + $0x70] sm:$0xff] %v614
        %647 = vst [vmem:[%s228 + $0x78] sm:$0xff] %v615
        %648 = vst [vmem:[%s228 + $0x80] sm:$0xff] %v616
        %649 = vst [vmem:[%s228 + $0x88] sm:$0xff] %v617
        %650 = vst [vmem:[%s228 + $0x90] sm:$0xff] %v618
        %651 = vst [vmem:[%s228 + $0x98] sm:$0xff] %v619
        %652 = vst [vmem:[%s228 + $0xa0] sm:$0xff] %v620
        %653 = vst [vmem:[%s228 + $0xa8] sm:$0xff] %v621
        %654 = vst [vmem:[%s228 + $0xb0] sm:$0xff] %v622
        %655 = vst [vmem:[%s228 + $0xb8] sm:$0xff] %v623
        %656 = vst [vmem:[%s228 + $0xc0] sm:$0xff] %v624
        %657 = vst [vmem:[%s228 + $0xc8] sm:$0xff] %v625
        %658 = vst [vmem:[%s228 + $0xd0] sm:$0xff] %v626
        %659 = vst [vmem:[%s228 + $0xd8] sm:$0xff] %v627
        %660 = vst [vmem:[%s228 + $0xe0] sm:$0xff] %v628
        %661 = vst [vmem:[%s228 + $0xe8] sm:$0xff] %v629
        %662 = vst [vmem:[%s228 + $0xf0] sm:$0xff] %v630
        %663 = vst [vmem:[%s228 + $0xf8] sm:$0xff] %v631
        // Predicated region
        $region37: #{_conv2d_impl.1} parent=31 // pred_check
          %p664 = pneg %p251
        $region38: #{_conv2d_impl.1} parent=31 // pred_check_branch
          %666 = sbr.rel (%p664) target = $region40
        $region39: #{_conv2d_impl.1} parent=31 // pred_region
          %v667 = vld [vmem:[%s228] sm:$0xff]
          %v668 = vld [vmem:[%s228 + $0x8] sm:$0xff]
          %v669 = vld [vmem:[%s228 + $0x10] sm:$0xff]
          %v670 = vld [vmem:[%s228 + $0x18] sm:$0xff]
          %v671 = vld [vmem:[%s228 + $0x20] sm:$0xff]
          %v672 = vld [vmem:[%s228 + $0x28] sm:$0xff]
          %v673 = vld [vmem:[%s228 + $0x30] sm:$0xff]
          %v674 = vld [vmem:[%s228 + $0x38] sm:$0xff]
          %v675 = vld [vmem:[%s228 + $0x40] sm:$0xff]
          %v676 = vld [vmem:[%s228 + $0x48] sm:$0xff]
          %v677 = vld [vmem:[%s228 + $0x50] sm:$0xff]
          %v678 = vld [vmem:[%s228 + $0x58] sm:$0xff]
          %v679 = vld [vmem:[%s228 + $0x60] sm:$0xff]
          %v680 = vld [vmem:[%s228 + $0x68] sm:$0xff]
          %v681 = vld [vmem:[%s228 + $0x70] sm:$0xff]
          %v682 = vld [vmem:[%s228 + $0x78] sm:$0xff]
          %v683 = vld [vmem:[%s228 + $0x80] sm:$0xff]
          %v684 = vld [vmem:[%s228 + $0x88] sm:$0xff]
          %v685 = vld [vmem:[%s228 + $0x90] sm:$0xff]
          %v686 = vld [vmem:[%s228 + $0x98] sm:$0xff]
          %v687 = vld [vmem:[%s228 + $0xa0] sm:$0xff]
          %v688 = vld [vmem:[%s228 + $0xa8] sm:$0xff]
          %v689 = vld [vmem:[%s228 + $0xb0] sm:$0xff]
          %v690 = vld [vmem:[%s228 + $0xb8] sm:$0xff]
          %v691 = vld [vmem:[%s228 + $0xc0] sm:$0xff]
          %v692 = vld [vmem:[%s228 + $0xc8] sm:$0xff]
          %v693 = vld [vmem:[%s228 + $0xd0] sm:$0xff]
          %v694 = vld [vmem:[%s228 + $0xd8] sm:$0xff]
          %v695 = vld [vmem:[%s228 + $0xe0] sm:$0xff]
          %v696 = vld [vmem:[%s228 + $0xe8] sm:$0xff]
          %v697 = vld [vmem:[%s228 + $0xf0] sm:$0xff]
          %v698 = vld [vmem:[%s228 + $0xf8] sm:$0xff]
          %v699 = vld [vmem:[%s249] sm:$0x1]
          %v701 = vperm.slane %v699, 0
          %v703 = vadd.f32 %v667, %v701
          %v704 = vadd.f32 %v668, %v701
          %v705 = vadd.f32 %v669, %v701
          %v706 = vadd.f32 %v670, %v701
          %v707 = vadd.f32 %v671, %v701
          %v708 = vadd.f32 %v672, %v701
          %v709 = vadd.f32 %v673, %v701
          %v710 = vadd.f32 %v674, %v701
          %v711 = vadd.f32 %v675, %v701
          %v712 = vadd.f32 %v676, %v701
          %v713 = vadd.f32 %v677, %v701
          %v714 = vadd.f32 %v678, %v701
          %v715 = vadd.f32 %v679, %v701
          %v716 = vadd.f32 %v680, %v701
          %v717 = vadd.f32 %v681, %v701
          %v718 = vadd.f32 %v682, %v701
          %v719 = vadd.f32 %v683, %v701
          %v720 = vadd.f32 %v684, %v701
          %v721 = vadd.f32 %v685, %v701
          %v722 = vadd.f32 %v686, %v701
          %v723 = vadd.f32 %v687, %v701
          %v724 = vadd.f32 %v688, %v701
          %v725 = vadd.f32 %v689, %v701
          %v726 = vadd.f32 %v690, %v701
          %v727 = vadd.f32 %v691, %v701
          %v728 = vadd.f32 %v692, %v701
          %v729 = vadd.f32 %v693, %v701
          %v730 = vadd.f32 %v694, %v701
          %v731 = vadd.f32 %v695, %v701
          %v732 = vadd.f32 %v696, %v701
          %v733 = vadd.f32 %v697, %v701
          %v734 = vadd.f32 %v698, %v701
          %vm735 = vcmp.gt.f32.partialorder %v703, 0.0
          %vm736 = vcmp.gt.f32.partialorder %v704, 0.0
          %vm737 = vcmp.gt.f32.partialorder %v705, 0.0
          %vm738 = vcmp.gt.f32.partialorder %v706, 0.0
          %vm739 = vcmp.gt.f32.partialorder %v707, 0.0
          %vm740 = vcmp.gt.f32.partialorder %v708, 0.0
          %vm741 = vcmp.gt.f32.partialorder %v709, 0.0
          %vm742 = vcmp.gt.f32.partialorder %v710, 0.0
          %vm743 = vcmp.gt.f32.partialorder %v711, 0.0
          %vm744 = vcmp.gt.f32.partialorder %v712, 0.0
          %vm745 = vcmp.gt.f32.partialorder %v713, 0.0
          %vm746 = vcmp.gt.f32.partialorder %v714, 0.0
          %vm747 = vcmp.gt.f32.partialorder %v715, 0.0
          %vm748 = vcmp.gt.f32.partialorder %v716, 0.0
          %vm749 = vcmp.gt.f32.partialorder %v717, 0.0
          %vm750 = vcmp.gt.f32.partialorder %v718, 0.0
          %vm751 = vcmp.gt.f32.partialorder %v719, 0.0
          %vm752 = vcmp.gt.f32.partialorder %v720, 0.0
          %vm753 = vcmp.gt.f32.partialorder %v721, 0.0
          %vm754 = vcmp.gt.f32.partialorder %v722, 0.0
          %vm755 = vcmp.gt.f32.partialorder %v723, 0.0
          %vm756 = vcmp.gt.f32.partialorder %v724, 0.0
          %vm757 = vcmp.gt.f32.partialorder %v725, 0.0
          %vm758 = vcmp.gt.f32.partialorder %v726, 0.0
          %vm759 = vcmp.gt.f32.partialorder %v727, 0.0
          %vm760 = vcmp.gt.f32.partialorder %v728, 0.0
          %vm761 = vcmp.gt.f32.partialorder %v729, 0.0
          %vm762 = vcmp.gt.f32.partialorder %v730, 0.0
          %vm763 = vcmp.gt.f32.partialorder %v731, 0.0
          %vm764 = vcmp.gt.f32.partialorder %v732, 0.0
          %vm765 = vcmp.gt.f32.partialorder %v733, 0.0
          %vm766 = vcmp.gt.f32.partialorder %v734, 0.0
          %v767 = vmul.f32 %v703, 0.2
          %v768 = vmul.f32 %v704, 0.2
          %v769 = vmul.f32 %v705, 0.2
          %v770 = vmul.f32 %v706, 0.2
          %v771 = vmul.f32 %v707, 0.2
          %v772 = vmul.f32 %v708, 0.2
          %v773 = vmul.f32 %v709, 0.2
          %v774 = vmul.f32 %v710, 0.2
          %v775 = vmul.f32 %v711, 0.2
          %v776 = vmul.f32 %v712, 0.2
          %v777 = vmul.f32 %v713, 0.2
          %v778 = vmul.f32 %v714, 0.2
          %v779 = vmul.f32 %v715, 0.2
          %v780 = vmul.f32 %v716, 0.2
          %v781 = vmul.f32 %v717, 0.2
          %v782 = vmul.f32 %v718, 0.2
          %v783 = vmul.f32 %v719, 0.2
          %v784 = vmul.f32 %v720, 0.2
          %v785 = vmul.f32 %v721, 0.2
          %v786 = vmul.f32 %v722, 0.2
          %v787 = vmul.f32 %v723, 0.2
          %v788 = vmul.f32 %v724, 0.2
          %v789 = vmul.f32 %v725, 0.2
          %v790 = vmul.f32 %v726, 0.2
          %v791 = vmul.f32 %v727, 0.2
          %v792 = vmul.f32 %v728, 0.2
          %v793 = vmul.f32 %v729, 0.2
          %v794 = vmul.f32 %v730, 0.2
          %v795 = vmul.f32 %v731, 0.2
          %v796 = vmul.f32 %v732, 0.2
          %v797 = vmul.f32 %v733, 0.2
          %v798 = vmul.f32 %v734, 0.2
          %v799 = vsel %vm735, %v703, %v767
          %v800 = vsel %vm736, %v704, %v768
          %v801 = vsel %vm737, %v705, %v769
          %v802 = vsel %vm738, %v706, %v770
          %v803 = vsel %vm739, %v707, %v771
          %v804 = vsel %vm740, %v708, %v772
          %v805 = vsel %vm741, %v709, %v773
          %v806 = vsel %vm742, %v710, %v774
          %v807 = vsel %vm743, %v711, %v775
          %v808 = vsel %vm744, %v712, %v776
          %v809 = vsel %vm745, %v713, %v777
          %v810 = vsel %vm746, %v714, %v778
          %v811 = vsel %vm747, %v715, %v779
          %v812 = vsel %vm748, %v716, %v780
          %v813 = vsel %vm749, %v717, %v781
          %v814 = vsel %vm750, %v718, %v782
          %v815 = vsel %vm751, %v719, %v783
          %v816 = vsel %vm752, %v720, %v784
          %v817 = vsel %vm753, %v721, %v785
          %v818 = vsel %vm754, %v722, %v786
          %v819 = vsel %vm755, %v723, %v787
          %v820 = vsel %vm756, %v724, %v788
          %v821 = vsel %vm757, %v725, %v789
          %v822 = vsel %vm758, %v726, %v790
          %v823 = vsel %vm759, %v727, %v791
          %v824 = vsel %vm760, %v728, %v792
          %v825 = vsel %vm761, %v729, %v793
          %v826 = vsel %vm762, %v730, %v794
          %v827 = vsel %vm763, %v731, %v795
          %v828 = vsel %vm764, %v732, %v796
          %v829 = vsel %vm765, %v733, %v797
          %v830 = vsel %vm766, %v734, %v798
          %831 = vst [vmem:[%s228] sm:$0xff] %v799
          %832 = vst [vmem:[%s228 + $0x8] sm:$0xff] %v800
          %833 = vst [vmem:[%s228 + $0x10] sm:$0xff] %v801
          %834 = vst [vmem:[%s228 + $0x18] sm:$0xff] %v802
          %835 = vst [vmem:[%s228 + $0x20] sm:$0xff] %v803
          %836 = vst [vmem:[%s228 + $0x28] sm:$0xff] %v804
          %837 = vst [vmem:[%s228 + $0x30] sm:$0xff] %v805
          %838 = vst [vmem:[%s228 + $0x38] sm:$0xff] %v806
          %839 = vst [vmem:[%s228 + $0x40] sm:$0xff] %v807
          %840 = vst [vmem:[%s228 + $0x48] sm:$0xff] %v808
          %841 = vst [vmem:[%s228 + $0x50] sm:$0xff] %v809
          %842 = vst [vmem:[%s228 + $0x58] sm:$0xff] %v810
          %843 = vst [vmem:[%s228 + $0x60] sm:$0xff] %v811
          %844 = vst [vmem:[%s228 + $0x68] sm:$0xff] %v812
          %845 = vst [vmem:[%s228 + $0x70] sm:$0xff] %v813
          %846 = vst [vmem:[%s228 + $0x78] sm:$0xff] %v814
          %847 = vst [vmem:[%s228 + $0x80] sm:$0xff] %v815
          %848 = vst [vmem:[%s228 + $0x88] sm:$0xff] %v816
          %849 = vst [vmem:[%s228 + $0x90] sm:$0xff] %v817
          %850 = vst [vmem:[%s228 + $0x98] sm:$0xff] %v818
          %851 = vst [vmem:[%s228 + $0xa0] sm:$0xff] %v819
          %852 = vst [vmem:[%s228 + $0xa8] sm:$0xff] %v820
          %853 = vst [vmem:[%s228 + $0xb0] sm:$0xff] %v821
          %854 = vst [vmem:[%s228 + $0xb8] sm:$0xff] %v822
          %855 = vst [vmem:[%s228 + $0xc0] sm:$0xff] %v823
          %856 = vst [vmem:[%s228 + $0xc8] sm:$0xff] %v824
          %857 = vst [vmem:[%s228 + $0xd0] sm:$0xff] %v825
          %858 = vst [vmem:[%s228 + $0xd8] sm:$0xff] %v826
          %859 = vst [vmem:[%s228 + $0xe0] sm:$0xff] %v827
          %860 = vst [vmem:[%s228 + $0xe8] sm:$0xff] %v828
          %861 = vst [vmem:[%s228 + $0xf0] sm:$0xff] %v829
          %862 = vst [vmem:[%s228 + $0xf8] sm:$0xff] %v830
        $region40: #{_conv2d_impl.1} parent=31 // pred_fallthru
          _
        %s863 = sand.u32 %s128, 1
        %s864 = scalar_lea.sflag [#allocation3], %s863
        %s865 = sand.u32 %s128, 1
        %s866 = smul.addr %s865, 256
        %s867 = scalar_lea.vmem [#allocation2], %s866
        // Predicated region
        $region41: #{_conv2d_impl.1} parent=31 // pred_check
          %p868 = pneg %p138
        $region42: #{_conv2d_impl.1} parent=31 // pred_check_branch
          %870 = sbr.rel (%p868) target = $region44
        $region43: #{_conv2d_impl.1} parent=31 // pred_region
          %s871 = smul.u32 32, %s22
          %873 = vsyncadd %s864, 0
          %s874 = sadd.s32 %s23, %s871
          %s875 = smul.addr %s874, 8
          %s876 = scalar_lea.hbm %s3, %s875
          %s877 = sshll.u32 %s867, 4
          %s878 = int_to_ptr.vmem [resolvable:$true] %s877
          %s879 = sshll.u32 %s876, 4
          %s880 = int_to_ptr.hbm [resolvable:$true] %s879
          %885 = dma.vmem_to_hbm [thread:$0]  %s878, 4096, %s880, %s864, 128, 128, 8
        $region44: #{_conv2d_impl.1} parent=31 // pred_fallthru
          _
      $region32: #{_conv2d_impl.1} parent=5 // pred_fallthru
        _
      %p886 = scmp.le.s32.totalorder 2, %s12
      // Predicated region
      $region45: #{_conv2d_impl.1} parent=5 // pred_check
        %p887 = pneg %p886
      $region46: #{_conv2d_impl.1} parent=5 // pred_check_branch
        %889 = sbr.rel (%p887) target = $region48
      $region47: #{_conv2d_impl.1} parent=5 // pred_region
        %s890 = ssub.s32 %s12, 2
        // Predicated region
        $region49: #{_conv2d_impl.1} parent=47 // pred_check
          %p891 = pneg %p144
        $region50: #{_conv2d_impl.1} parent=47 // pred_check_branch
          %893 = sbr.rel (%p891) target = $region52
        $region51: #{_conv2d_impl.1} parent=47 // pred_region
          %s894 = sand.u32 %s129, 1
          %s895 = scalar_lea.sflag [#allocation3], %s894
          %s896 = sand.u32 %s129, 1
          %s897 = smul.addr %s896, 256
          %s898 = scalar_lea.vmem [#allocation2], %s897
          %900 = dma.done %s895, 4096
        $region52: #{_conv2d_impl.1} parent=47 // pred_fallthru
          _
      $region48: #{_conv2d_impl.1} parent=5 // pred_fallthru
        _
    $region6: #{_conv2d_impl.1} parent=1 // loop_footer
      %s16 = sadd.s32 1, %s12
    $region7: #{_conv2d_impl.1} parent=1 // loop_footer_branch
      %11 = sbr.rel target = $region3
    $region8: #{_conv2d_impl.1} parent=1 // loop_exit
      _
    %901 = vsyncpa [#allocation3], 1
    %s902 = scalar_lea.sflag [#allocation3], 1
    %903 = vsyncpa %s902, 1

</llo_original>
